<compile_context>
chip_gen: v7x
topology: tpu7x:2x2x1
jax: 0.10.0
libtpu: 0.0.40
codegen_flags: <defaults>
</compile_context>

<pallas_src>
import jax
import jax.numpy as jnp
from jax import lax
from jax.experimental import pallas as pl
from jax.experimental.pallas import tpu as pltpu


def _fc_flatten_kernel(x_ref, w_ref, b_ref, o_ref):
    # x_ref: (bn, bk)     bf16 slice of the flattened activation (lane-dense).
    # w_ref: (Fp, bk)     bf16 slice of the UNtransposed FC weight (lane-dense).
    # b_ref: (1, Fp)      f32 bias (resident).
    # o_ref: (bn, Fp)     f32 output block, resident across the K axis;
    #                     doubles as the accumulator (no VMEM scratch needed).
    k = pl.program_id(1)

    @pl.when(k == 0)
    def _():
        o_ref[...] = jnp.zeros_like(o_ref)

    # x @ w^T : contract x dim 1 with w dim 1 on the MXU, f32 accumulation.
    o_ref[...] += lax.dot_general(
        x_ref[...], w_ref[...],
        dimension_numbers=(((1,), (1,)), ((), ())),
        preferred_element_type=jnp.float32,
    )

    @pl.when(k == pl.num_programs(1) - 1)
    def _():
        o_ref[...] += b_ref[...]


def classifier_head(x1: jax.Array, w: jax.Array, b: jax.Array,
                    *, block_k: int = 4096) -> jax.Array:
    """features[12:] (AvgPool2d(1) + Flatten) + Dropout(eval) + fc, with the
    flatten fused into the FC matmul kernel."""
    n = x1.shape[0]
    k_dim = 1
    for d in x1.shape[1:]:
        k_dim *= d
    f = w.shape[0]
    assert w.shape == (f, k_dim), (w.shape, (f, k_dim))

    # AvgPool2d(1) is identity; Flatten is a free metadata reshape; Dropout is
    # identity at inference.
    x2 = x1.reshape(n, k_dim)

    # bf16 operands (MXU-native, halves HBM weight stream); accumulate in f32.
    x2 = x2.astype(jnp.bfloat16)
    wq = w.astype(jnp.bfloat16)
    b2 = b.astype(jnp.float32).reshape(1, f)

    # Pad F to a multiple of 128 so output / weight-sublane dims are dense.
    f_pad = ((f + 127) // 128) * 128
    if f_pad != f:
        wq = jnp.pad(wq, ((0, f_pad - f), (0, 0)))
        b2 = jnp.pad(b2, ((0, 0), (0, f_pad - f)))

    # Choose the K block (multiple of 128) and zero-pad K to a block multiple
    # (zero padding contributes nothing to the dot product).
    bk = min(block_k, max(k_dim, 128))
    bk = ((bk + 127) // 128) * 128
    n_kb = pl.cdiv(k_dim, bk)
    k_pad = n_kb * bk
    if k_pad != k_dim:
        x2 = jnp.pad(x2, ((0, 0), (0, k_pad - k_dim)))
        wq = jnp.pad(wq, ((0, 0), (0, k_pad - k_dim)))

    # Optional parallel batch axis: two N blocks when batch is a multiple of 16
    # so v7x's second TensorCore gets work; otherwise a single (size-1) block.
    if n % 16 == 0:
        bn = n // 2
    else:
        bn = n
    n_nb = n // bn

    out_padded = pl.pallas_call(
        _fc_flatten_kernel,
        out_shape=jax.ShapeDtypeStruct((n, f_pad), jnp.float32),
        grid_spec=pltpu.PrefetchScalarGridSpec(
            num_scalar_prefetch=0,
            grid=(n_nb, n_kb),
            in_specs=[
                pl.BlockSpec((bn, bk), lambda i, k: (i, k)),      # activations
                pl.BlockSpec((f_pad, bk), lambda i, k: (0, k)),   # weight (F,K)
                pl.BlockSpec((1, f_pad), lambda i, k: (0, 0)),    # bias
            ],
            out_specs=pl.BlockSpec((bn, f_pad), lambda i, k: (i, 0)),
        ),
        compiler_params=pltpu.CompilerParams(
            dimension_semantics=("parallel", "arbitrary"),
        ),
    )(x2, wq, b2)

    # Slice the lane padding back off: logits are (N, 10) float32.
    return out_padded[:, :f]


def vgg_head_forward(x1, w, b):
    """Mirrors vgg.forward from x1 onward: returns (out, x1)."""
    out = classifier_head(x1, w, b)
    return out, x1


if __name__ == "__main__":
    key = jax.random.PRNGKey(0)
    k1, k2, k3 = jax.random.split(key, 3)

    # x1: small stand-in for the features[:12] output (real model: 256x8x8 -> 16384).
    x1 = jax.random.normal(k1, (2, 4, 16, 16), dtype=jnp.float32)
    flat = 4 * 16 * 16            # 1024
    n_classes = 10
    w = jax.random.normal(k2, (n_classes, flat), dtype=jnp.float32) * 0.02
    b = jax.random.normal(k3, (n_classes,), dtype=jnp.float32)

    out, x1_out = vgg_head_forward(x1, w, b)
    out = jax.block_until_ready(out)

    # Reference 1: same bf16 operand rounding, f32 accumulation (matches kernel).
    xf = x1.reshape(x1.shape[0], -1).astype(jnp.bfloat16).astype(jnp.float32)
    wf = w.astype(jnp.bfloat16).astype(jnp.float32)
    ref = xf @ wf.T + b
    assert out.shape == ref.shape, (out.shape, ref.shape)
    assert out.dtype == jnp.float32, out.dtype
    assert jnp.allclose(out, ref, atol=2e-3, rtol=2e-3), float(
        jnp.max(jnp.abs(out - ref)))

    # Reference 2: pure-f32 torch semantics (loose, bf16 operand rounding only).
    ref_f32 = x1.reshape(x1.shape[0], -1) @ w.T + b
    assert jnp.allclose(out, ref_f32, atol=1e-1, rtol=1e-1), float(
        jnp.max(jnp.abs(out - ref_f32)))

    assert x1_out.shape == x1.shape and jnp.array_equal(x1_out, x1)

    print("KERNEL_OK")
</pallas_src>

<mosaic_0001>
module attributes {stable_mosaic.version = 11 : i64} {
  func.func @_fc_flatten_kernel(%arg0: i32, %arg1: i32, %arg2: memref<2x1024xbf16, #tpu.memory_space<vmem>>, %arg3: memref<128x1024xbf16, #tpu.memory_space<vmem>>, %arg4: memref<1x128xf32, #tpu.memory_space<vmem>>, %arg5: memref<2x128xf32, #tpu.memory_space<vmem>>) attributes {dimension_semantics = [#tpu.dimension_semantics<parallel>, #tpu.dimension_semantics<arbitrary>], iteration_bounds = array<i64: 1, 1>, scalar_prefetch = 0 : i64, scratch_operands = 0 : i64, tpu.core_type = #tpu.core_type<tc>, window_params = [{transform_indices = @transform_0, window_bounds = array<i64: 2, 1024>}, {transform_indices = @transform_1, window_bounds = array<i64: 128, 1024>}, {pipeline_mode = #tpu.pipeline_mode<synchronous>, transform_indices = @transform_2, window_bounds = array<i64: 1, 128>}, {transform_indices = @transform_3, window_bounds = array<i64: 2, 128>}]} {
    %c0_i32 = arith.constant 0 : i32
    %0 = arith.cmpi eq, %arg1, %c0_i32 : i32
    %1 = arith.extui %0 : i1 to i32
    %c0_i32_0 = arith.constant 0 : i32
    %2 = arith.cmpi ne, %1, %c0_i32_0 : i32
    scf.if %2 {
      %cst_10 = arith.constant 0.000000e+00 : f32
      %12 = vector.broadcast %cst_10 : f32 to vector<2x128xf32>
      %c0_11 = arith.constant 0 : index
      %c0_12 = arith.constant 0 : index
      %13 = vector.load %arg5[%c0_11, %c0_12] : memref<2x128xf32, #tpu.memory_space<vmem>>, vector<2x128xf32>
      tpu.vector_store %arg5[%c0_11, %c0_12], %12 {strides = array<i32>} : memref<2x128xf32, #tpu.memory_space<vmem>>, vector<2x128xf32>,
    } else {
    }
    %c0 = arith.constant 0 : index
    %c0_1 = arith.constant 0 : index
    %3 = vector.load %arg5[%c0, %c0_1] : memref<2x128xf32, #tpu.memory_space<vmem>>, vector<2x128xf32>
    %c0_2 = arith.constant 0 : index
    %c0_3 = arith.constant 0 : index
    %4 = vector.load %arg2[%c0_2, %c0_3] : memref<2x1024xbf16, #tpu.memory_space<vmem>>, vector<2x1024xbf16>
    %c0_4 = arith.constant 0 : index
    %c0_5 = arith.constant 0 : index
    %5 = vector.load %arg3[%c0_4, %c0_5] : memref<128x1024xbf16, #tpu.memory_space<vmem>>, vector<128x1024xbf16>
    %cst = arith.constant dense<0.000000e+00> : vector<2x128xf32>
    %6 = tpu.matmul %4, %5, %cst {dimension_numbers = #tpu.dot_dimension_numbers<[1], [1], [0], [0], [0, 0, 1, 0], [], []>} : vector<2x1024xbf16>, vector<128x1024xbf16>, vector<2x128xf32> -> vector<2x128xf32>
    %7 = arith.addf %3, %6 : vector<2x128xf32>
    %c0_6 = arith.constant 0 : index
    %c0_7 = arith.constant 0 : index
    %8 = vector.load %arg5[%c0_6, %c0_7] : memref<2x128xf32, #tpu.memory_space<vmem>>, vector<2x128xf32>
    tpu.vector_store %arg5[%c0_6, %c0_7], %7 {strides = array<i32>} : memref<2x128xf32, #tpu.memory_space<vmem>>, vector<2x128xf32>,
    %c0_i32_8 = arith.constant 0 : i32
    %9 = arith.cmpi eq, %arg1, %c0_i32_8 : i32
    %10 = arith.extui %9 : i1 to i32
    %c0_i32_9 = arith.constant 0 : i32
    %11 = arith.cmpi ne, %10, %c0_i32_9 : i32
    scf.if %11 {
      %c0_10 = arith.constant 0 : index
      %c0_11 = arith.constant 0 : index
      %12 = vector.load %arg5[%c0_10, %c0_11] : memref<2x128xf32, #tpu.memory_space<vmem>>, vector<2x128xf32>
      %c0_12 = arith.constant 0 : index
      %c0_13 = arith.constant 0 : index
      %13 = vector.load %arg4[%c0_12, %c0_13] : memref<1x128xf32, #tpu.memory_space<vmem>>, vector<1x128xf32>
      %14 = vector.broadcast %13 : vector<1x128xf32> to vector<2x128xf32>
      %15 = arith.addf %12, %14 : vector<2x128xf32>
      %c0_14 = arith.constant 0 : index
      %c0_15 = arith.constant 0 : index
      %16 = vector.load %arg5[%c0_14, %c0_15] : memref<2x128xf32, #tpu.memory_space<vmem>>, vector<2x128xf32>
      tpu.vector_store %arg5[%c0_14, %c0_15], %15 {strides = array<i32>} : memref<2x128xf32, #tpu.memory_space<vmem>>, vector<2x128xf32>,
    } else {
    }
    return
  }
  func.func @transform_0(%arg0: i32, %arg1: i32) -> (i32, i32) {
    %c0_i32 = arith.constant 0 : i32
    return %arg0, %arg1 : i32, i32
  }
  func.func @transform_1(%arg0: i32, %arg1: i32) -> (i32, i32) {
    %c0_i32 = arith.constant 0 : i32
    %c0_i32_0 = arith.constant 0 : i32
    return %c0_i32, %arg1 : i32, i32
  }
  func.func @transform_2(%arg0: i32, %arg1: i32) -> (i32, i32) {
    %c0_i32 = arith.constant 0 : i32
    %c0_i32_0 = arith.constant 0 : i32
    %c0_i32_1 = arith.constant 0 : i32
    return %c0_i32, %c0_i32_0 : i32, i32
  }
  func.func @transform_3(%arg0: i32, %arg1: i32) -> (i32, i32) {
    %c0_i32 = arith.constant 0 : i32
    %c0_i32_0 = arith.constant 0 : i32
    return %arg0, %c0_i32 : i32, i32
  }
}

</mosaic_0001>

<llo_original>
// kernel: tpu_custom_call.1
$region0: #{tpu_custom_call.1}
  #allocation0 [shape = 'u32[]', space=smem, size = 0x4, offset = 0x4, fixed_abs, tag = 'smem constant byte address 0x4 - core index']
  #allocation1 [shape = 'u32[144,128]{1,0:T(1,128)}', space=vmem, size = 0x12000, scoped, tag = 'internal scratch']
  %s0 = inlined_call_operand.hbm [shape: bf16[2,1024], index: 0, kind: input, shape index: {}]
  %s1 = inlined_call_operand.hbm [shape: bf16[128,1024], index: 1, kind: input, shape index: {}]
  %s2 = inlined_call_operand.vmem [shape: f32[1,128], index: 2, kind: input, shape index: {}]
  %s3 = inlined_call_operand.hbm [shape: f32[2,128], index: 3, kind: output, shape index: {}]
  %s4 = sld [smem:[#allocation0]]
  $region38: #{tpu_custom_call.1} parent=0
    _
  %s6 = ssub.s32 1, %s4
  %s7 = scalar_select 0, %s6, %s4
  $region1: #{tpu_custom_call.1} parent=0
    #allocation2 [shape = 'u8[4096]{0}', space=vmem, size = 0x1000, scoped, tag = 'input window, operand 0, single buffered']
    #allocation3 [shape = 's32[1]{0}', space=sflag, size = 0x4, scoped, tag = 'scoped memory for tpu_custom_call.1']
    #allocation4 [shape = 's32[1]{0}', space=sflag, size = 0x4, scoped, tag = 'scoped memory for tpu_custom_call.1']
    #allocation5 [shape = 'u8[262144]{0}', space=vmem, size = 0x40000, scoped, tag = 'input window, operand 1, single buffered']
    #allocation6 [shape = 's32[1]{0}', space=sflag, size = 0x4, scoped, tag = 'scoped memory for tpu_custom_call.1']
    #allocation7 [shape = 'u8[1024]{0}', space=vmem, size = 0x400, scoped, tag = 'output window, operand 0, single buffered']
    %8 = vsyncpa [#allocation3], 0
    %9 = vsyncpa [#allocation6], 0
    %10 = vsyncpa [#allocation4], 0
    // Predicated region
    $region2: #{tpu_custom_call.1} parent=1 // pred_check
      _
    $region3: #{tpu_custom_call.1} parent=1 // pred_check_branch
      %12 = sbr.rel (0) target = $region5
    $region4: #{tpu_custom_call.1} parent=1 // pred_region
      %s14 = ssub.s32 128, 128
      %15 = vsyncadd [#allocation3], %s14
      %s17 = sshll.u32 [#allocation2], 4
      %s18 = int_to_ptr.vmem [resolvable:$true] %s17
      %20 = dma.hbm_to_vmem [thread:$0]  %s0, 128, %s18, [#allocation3]
    $region5: #{tpu_custom_call.1} parent=1 // pred_fallthru
      _
    // Predicated region
    $region6: #{tpu_custom_call.1} parent=1 // pred_check
      _
    $region7: #{tpu_custom_call.1} parent=1 // pred_check_branch
      %22 = sbr.rel (0) target = $region9
    $region8: #{tpu_custom_call.1} parent=1 // pred_region
      %s24 = ssub.s32 8192, 8192
      %25 = vsyncadd [#allocation6], %s24
      %s26 = sshll.u32 [#allocation5], 4
      %s27 = int_to_ptr.vmem [resolvable:$true] %s26
      %32 = dma.hbm_to_vmem [thread:$0]  %s1, 8192, %s27, [#allocation6], 512, 512, 32
    $region9: #{tpu_custom_call.1} parent=1 // pred_fallthru
      _
    // Predicated region
    $region10: #{tpu_custom_call.1} parent=1 // pred_check
      _
    $region11: #{tpu_custom_call.1} parent=1 // pred_check_branch
      %34 = sbr.rel (0) target = $region13
    $region12: #{tpu_custom_call.1} parent=1 // pred_region
      _
    $region13: #{tpu_custom_call.1} parent=1 // pred_fallthru
      _
    // Predicated region
    $region14: #{tpu_custom_call.1} parent=1 // pred_check
      _
    $region15: #{tpu_custom_call.1} parent=1 // pred_check_branch
      %36 = sbr.rel (0) target = $region17
    $region16: #{tpu_custom_call.1} parent=1 // pred_region
      %37 = dma.done [#allocation3], 128
    $region17: #{tpu_custom_call.1} parent=1 // pred_fallthru
      _
    // Predicated region
    $region18: #{tpu_custom_call.1} parent=1 // pred_check
      _
    $region19: #{tpu_custom_call.1} parent=1 // pred_check_branch
      %39 = sbr.rel (0) target = $region21
    $region20: #{tpu_custom_call.1} parent=1 // pred_region
      %40 = dma.done [#allocation6], 8192
    $region21: #{tpu_custom_call.1} parent=1 // pred_fallthru
      _
    %p42 = scmp.eq.s32.totalorder 0, 0
    // Predicated region
    $region22: #{tpu_custom_call.1} parent=1 // pred_check
      %p43 = pneg %p42
    $region23: #{tpu_custom_call.1} parent=1 // pred_check_branch
      %45 = sbr.rel (%p43) target = $region25
    $region24: #{tpu_custom_call.1} parent=1 // pred_region
      %46 = vst [vmem:[#allocation7] sm:$0x3] 0.0
    $region25: #{tpu_custom_call.1} parent=1 // pred_fallthru
      _
    %v47 = vld [vmem:[#allocation7] sm:$0x3]
    %v48 = vld [vmem:[#allocation2] sm:$0xff]
    %v49 = vld [vmem:[#allocation5] sm:$0xff]
    %v50 = vld [vmem:[#allocation5 + $0x8] sm:$0xff]
    %v51 = vld [vmem:[#allocation5 + $0x10] sm:$0xff]
    %v52 = vld [vmem:[#allocation5 + $0x18] sm:$0xff]
    %v53 = vld [vmem:[#allocation5 + $0x20] sm:$0xff]
    %v54 = vld [vmem:[#allocation5 + $0x28] sm:$0xff]
    %v55 = vld [vmem:[#allocation5 + $0x30] sm:$0xff]
    %v56 = vld [vmem:[#allocation5 + $0x38] sm:$0xff]
    %v57 = vld [vmem:[#allocation5 + $0x40] sm:$0xff]
    %v58 = vld [vmem:[#allocation5 + $0x48] sm:$0xff]
    %v59 = vld [vmem:[#allocation5 + $0x50] sm:$0xff]
    %v60 = vld [vmem:[#allocation5 + $0x58] sm:$0xff]
    %v61 = vld [vmem:[#allocation5 + $0x60] sm:$0xff]
    %v62 = vld [vmem:[#allocation5 + $0x68] sm:$0xff]
    %v63 = vld [vmem:[#allocation5 + $0x70] sm:$0xff]
    %v64 = vld [vmem:[#allocation5 + $0x78] sm:$0xff]
    %v65 = vld [vmem:[#allocation5 + $0x80] sm:$0xff]
    %v66 = vld [vmem:[#allocation5 + $0x88] sm:$0xff]
    %v67 = vld [vmem:[#allocation5 + $0x90] sm:$0xff]
    %v68 = vld [vmem:[#allocation5 + $0x98] sm:$0xff]
    %v69 = vld [vmem:[#allocation5 + $0xa0] sm:$0xff]
    %v70 = vld [vmem:[#allocation5 + $0xa8] sm:$0xff]
    %v71 = vld [vmem:[#allocation5 + $0xb0] sm:$0xff]
    %v72 = vld [vmem:[#allocation5 + $0xb8] sm:$0xff]
    %v73 = vld [vmem:[#allocation5 + $0xc0] sm:$0xff]
    %v74 = vld [vmem:[#allocation5 + $0xc8] sm:$0xff]
    %v75 = vld [vmem:[#allocation5 + $0xd0] sm:$0xff]
    %v76 = vld [vmem:[#allocation5 + $0xd8] sm:$0xff]
    %v77 = vld [vmem:[#allocation5 + $0xe0] sm:$0xff]
    %v78 = vld [vmem:[#allocation5 + $0xe8] sm:$0xff]
    %v79 = vld [vmem:[#allocation5 + $0xf0] sm:$0xff]
    %v80 = vld [vmem:[#allocation5 + $0xf8] sm:$0xff]
    %v81 = vld [vmem:[#allocation5 + $0x100] sm:$0xff]
    %v82 = vld [vmem:[#allocation5 + $0x108] sm:$0xff]
    %v83 = vld [vmem:[#allocation5 + $0x110] sm:$0xff]
    %v84 = vld [vmem:[#allocation5 + $0x118] sm:$0xff]
    %v85 = vld [vmem:[#allocation5 + $0x120] sm:$0xff]
    %v86 = vld [vmem:[#allocation5 + $0x128] sm:$0xff]
    %v87 = vld [vmem:[#allocation5 + $0x130] sm:$0xff]
    %v88 = vld [vmem:[#allocation5 + $0x138] sm:$0xff]
    %v89 = vld [vmem:[#allocation5 + $0x140] sm:$0xff]
    %v90 = vld [vmem:[#allocation5 + $0x148] sm:$0xff]
    %v91 = vld [vmem:[#allocation5 + $0x150] sm:$0xff]
    %v92 = vld [vmem:[#allocation5 + $0x158] sm:$0xff]
    %v93 = vld [vmem:[#allocation5 + $0x160] sm:$0xff]
    %v94 = vld [vmem:[#allocation5 + $0x168] sm:$0xff]
    %v95 = vld [vmem:[#allocation5 + $0x170] sm:$0xff]
    %v96 = vld [vmem:[#allocation5 + $0x178] sm:$0xff]
    %v97 = vld [vmem:[#allocation5 + $0x180] sm:$0xff]
    %v98 = vld [vmem:[#allocation5 + $0x188] sm:$0xff]
    %v99 = vld [vmem:[#allocation5 + $0x190] sm:$0xff]
    %v100 = vld [vmem:[#allocation5 + $0x198] sm:$0xff]
    %v101 = vld [vmem:[#allocation5 + $0x1a0] sm:$0xff]
    %v102 = vld [vmem:[#allocation5 + $0x1a8] sm:$0xff]
    %v103 = vld [vmem:[#allocation5 + $0x1b0] sm:$0xff]
    %v104 = vld [vmem:[#allocation5 + $0x1b8] sm:$0xff]
    %v105 = vld [vmem:[#allocation5 + $0x1c0] sm:$0xff]
    %v106 = vld [vmem:[#allocation5 + $0x1c8] sm:$0xff]
    %v107 = vld [vmem:[#allocation5 + $0x1d0] sm:$0xff]
    %v108 = vld [vmem:[#allocation5 + $0x1d8] sm:$0xff]
    %v109 = vld [vmem:[#allocation5 + $0x1e0] sm:$0xff]
    %v110 = vld [vmem:[#allocation5 + $0x1e8] sm:$0xff]
    %v111 = vld [vmem:[#allocation5 + $0x1f0] sm:$0xff]
    %v112 = vld [vmem:[#allocation5 + $0x1f8] sm:$0xff]
    %v114 = vcombine.high %v48, %v48
    %v116 = vunpack.c.l.s4 1966171168
    %v117 = vunpack.c.0.s8 %v116
    %v118 = vlaneseq
    %v119 = vshrl.u32 %v118, 7
    %v120 = vsub.s32 %v117, %v119
    %v121 = vrot.slane %v48, %v120
    %v123 = vunpack.c.l.s4 1966171168
    %v124 = vunpack.c.0.s8 %v123
    %v125 = vlaneseq
    %v126 = vshrl.u32 %v125, 7
    %v127 = vsub.s32 %v124, %v126
    %v128 = vrot.slane %v114, %v127
    %v129 = vcombine.high %v121, %v121
    %v130 = vcombine.high %v128, %v128
    %v132 = vunpack.c.l.s4 1966171168
    %v133 = vunpack.c.0.s8 %v132
    %v134 = vlaneseq
    %v135 = vshrl.u32 %v134, 7
    %v136 = vsub.s32 %v133, %v135
    %v137 = vrot.slane %v121, %v136
    %v139 = vunpack.c.l.s4 1966171168
    %v140 = vunpack.c.0.s8 %v139
    %v141 = vlaneseq
    %v142 = vshrl.u32 %v141, 7
    %v143 = vsub.s32 %v140, %v142
    %v144 = vrot.slane %v128, %v143
    %v146 = vunpack.c.l.s4 1966171168
    %v147 = vunpack.c.0.s8 %v146
    %v148 = vlaneseq
    %v149 = vshrl.u32 %v148, 7
    %v150 = vsub.s32 %v147, %v149
    %v151 = vrot.slane %v129, %v150
    %v153 = vunpack.c.l.s4 1966171168
    %v154 = vunpack.c.0.s8 %v153
    %v155 = vlaneseq
    %v156 = vshrl.u32 %v155, 7
    %v157 = vsub.s32 %v154, %v156
    %v158 = vrot.slane %v130, %v157
    %v159 = vcombine.high %v137, %v137
    %v160 = vcombine.high %v144, %v144
    %v161 = vcombine.high %v151, %v151
    %v162 = vcombine.high %v158, %v158
    %v235 = vunpack.c.l.b16 %v49
    %v236 = vunpack.c.h.b16 %v49
    %v237 = vunpack.c.l.b16 %v50
    %v238 = vunpack.c.h.b16 %v50
    %v239 = vunpack.c.l.b16 %v51
    %v240 = vunpack.c.h.b16 %v51
    %v241 = vunpack.c.l.b16 %v52
    %v242 = vunpack.c.h.b16 %v52
    %v243 = vunpack.c.l.b16 %v53
    %v244 = vunpack.c.h.b16 %v53
    %v245 = vunpack.c.l.b16 %v54
    %v246 = vunpack.c.h.b16 %v54
    %v247 = vunpack.c.l.b16 %v55
    %v248 = vunpack.c.h.b16 %v55
    %v249 = vunpack.c.l.b16 %v56
    %v250 = vunpack.c.h.b16 %v56
    %v251 = vunpack.c.l.b16 %v57
    %v252 = vunpack.c.h.b16 %v57
    %v253 = vunpack.c.l.b16 %v58
    %v254 = vunpack.c.h.b16 %v58
    %v255 = vunpack.c.l.b16 %v59
    %v256 = vunpack.c.h.b16 %v59
    %v257 = vunpack.c.l.b16 %v60
    %v258 = vunpack.c.h.b16 %v60
    %v259 = vunpack.c.l.b16 %v61
    %v260 = vunpack.c.h.b16 %v61
    %v261 = vunpack.c.l.b16 %v62
    %v262 = vunpack.c.h.b16 %v62
    %v263 = vunpack.c.l.b16 %v63
    %v264 = vunpack.c.h.b16 %v63
    %v265 = vunpack.c.l.b16 %v64
    %v266 = vunpack.c.h.b16 %v64
    %v267 = vunpack.c.l.b16 %v65
    %v268 = vunpack.c.h.b16 %v65
    %v269 = vunpack.c.l.b16 %v66
    %v270 = vunpack.c.h.b16 %v66
    %v271 = vunpack.c.l.b16 %v67
    %v272 = vunpack.c.h.b16 %v67
    %v273 = vunpack.c.l.b16 %v68
    %v274 = vunpack.c.h.b16 %v68
    %v275 = vunpack.c.l.b16 %v69
    %v276 = vunpack.c.h.b16 %v69
    %v277 = vunpack.c.l.b16 %v70
    %v278 = vunpack.c.h.b16 %v70
    %v279 = vunpack.c.l.b16 %v71
    %v280 = vunpack.c.h.b16 %v71
    %v281 = vunpack.c.l.b16 %v72
    %v282 = vunpack.c.h.b16 %v72
    %v283 = vunpack.c.l.b16 %v73
    %v284 = vunpack.c.h.b16 %v73
    %v285 = vunpack.c.l.b16 %v74
    %v286 = vunpack.c.h.b16 %v74
    %v287 = vunpack.c.l.b16 %v75
    %v288 = vunpack.c.h.b16 %v75
    %v289 = vunpack.c.l.b16 %v76
    %v290 = vunpack.c.h.b16 %v76
    %v291 = vunpack.c.l.b16 %v77
    %v292 = vunpack.c.h.b16 %v77
    %v293 = vunpack.c.l.b16 %v78
    %v294 = vunpack.c.h.b16 %v78
    %v295 = vunpack.c.l.b16 %v79
    %v296 = vunpack.c.h.b16 %v79
    %v297 = vunpack.c.l.b16 %v80
    %v298 = vunpack.c.h.b16 %v80
    %v299 = vunpack.c.l.b16 %v81
    %v300 = vunpack.c.h.b16 %v81
    %v301 = vunpack.c.l.b16 %v82
    %v302 = vunpack.c.h.b16 %v82
    %v303 = vunpack.c.l.b16 %v83
    %v304 = vunpack.c.h.b16 %v83
    %v305 = vunpack.c.l.b16 %v84
    %v306 = vunpack.c.h.b16 %v84
    %v307 = vunpack.c.l.b16 %v85
    %v308 = vunpack.c.h.b16 %v85
    %v309 = vunpack.c.l.b16 %v86
    %v310 = vunpack.c.h.b16 %v86
    %v311 = vunpack.c.l.b16 %v87
    %v312 = vunpack.c.h.b16 %v87
    %v313 = vunpack.c.l.b16 %v88
    %v314 = vunpack.c.h.b16 %v88
    %v315 = vunpack.c.l.b16 %v89
    %v316 = vunpack.c.h.b16 %v89
    %v317 = vunpack.c.l.b16 %v90
    %v318 = vunpack.c.h.b16 %v90
    %v319 = vunpack.c.l.b16 %v91
    %v320 = vunpack.c.h.b16 %v91
    %v321 = vunpack.c.l.b16 %v92
    %v322 = vunpack.c.h.b16 %v92
    %v323 = vunpack.c.l.b16 %v93
    %v324 = vunpack.c.h.b16 %v93
    %v325 = vunpack.c.l.b16 %v94
    %v326 = vunpack.c.h.b16 %v94
    %v327 = vunpack.c.l.b16 %v95
    %v328 = vunpack.c.h.b16 %v95
    %v329 = vunpack.c.l.b16 %v96
    %v330 = vunpack.c.h.b16 %v96
    %v331 = vunpack.c.l.b16 %v97
    %v332 = vunpack.c.h.b16 %v97
    %v333 = vunpack.c.l.b16 %v98
    %v334 = vunpack.c.h.b16 %v98
    %v335 = vunpack.c.l.b16 %v99
    %v336 = vunpack.c.h.b16 %v99
    %v337 = vunpack.c.l.b16 %v100
    %v338 = vunpack.c.h.b16 %v100
    %v339 = vunpack.c.l.b16 %v101
    %v340 = vunpack.c.h.b16 %v101
    %v341 = vunpack.c.l.b16 %v102
    %v342 = vunpack.c.h.b16 %v102
    %v343 = vunpack.c.l.b16 %v103
    %v344 = vunpack.c.h.b16 %v103
    %v345 = vunpack.c.l.b16 %v104
    %v346 = vunpack.c.h.b16 %v104
    %v347 = vunpack.c.l.b16 %v105
    %v348 = vunpack.c.h.b16 %v105
    %v349 = vunpack.c.l.b16 %v106
    %v350 = vunpack.c.h.b16 %v106
    %v351 = vunpack.c.l.b16 %v107
    %v352 = vunpack.c.h.b16 %v107
    %v353 = vunpack.c.l.b16 %v108
    %v354 = vunpack.c.h.b16 %v108
    %v355 = vunpack.c.l.b16 %v109
    %v356 = vunpack.c.h.b16 %v109
    %v357 = vunpack.c.l.b16 %v110
    %v358 = vunpack.c.h.b16 %v110
    %v359 = vunpack.c.l.b16 %v111
    %v360 = vunpack.c.h.b16 %v111
    %v361 = vunpack.c.l.b16 %v112
    %v362 = vunpack.c.h.b16 %v112
    %v363 = vpack.c.b16 %v243, %v235
    %v364 = vpack.c.b16 %v244, %v236
    %v365 = vpack.c.b16 %v245, %v237
    %v366 = vpack.c.b16 %v246, %v238
    %v367 = vpack.c.b16 %v247, %v239
    %v368 = vpack.c.b16 %v248, %v240
    %v369 = vpack.c.b16 %v249, %v241
    %v370 = vpack.c.b16 %v250, %v242
    %v371 = vpack.c.b16 %v259, %v251
    %v372 = vpack.c.b16 %v260, %v252
    %v373 = vpack.c.b16 %v261, %v253
    %v374 = vpack.c.b16 %v262, %v254
    %v375 = vpack.c.b16 %v263, %v255
    %v376 = vpack.c.b16 %v264, %v256
    %v377 = vpack.c.b16 %v265, %v257
    %v378 = vpack.c.b16 %v266, %v258
    %v379 = vpack.c.b16 %v275, %v267
    %v380 = vpack.c.b16 %v276, %v268
    %v381 = vpack.c.b16 %v277, %v269
    %v382 = vpack.c.b16 %v278, %v270
    %v383 = vpack.c.b16 %v279, %v271
    %v384 = vpack.c.b16 %v280, %v272
    %v385 = vpack.c.b16 %v281, %v273
    %v386 = vpack.c.b16 %v282, %v274
    %v387 = vpack.c.b16 %v291, %v283
    %v388 = vpack.c.b16 %v292, %v284
    %v389 = vpack.c.b16 %v293, %v285
    %v390 = vpack.c.b16 %v294, %v286
    %v391 = vpack.c.b16 %v295, %v287
    %v392 = vpack.c.b16 %v296, %v288
    %v393 = vpack.c.b16 %v297, %v289
    %v394 = vpack.c.b16 %v298, %v290
    %v395 = vpack.c.b16 %v307, %v299
    %v396 = vpack.c.b16 %v308, %v300
    %v397 = vpack.c.b16 %v309, %v301
    %v398 = vpack.c.b16 %v310, %v302
    %v399 = vpack.c.b16 %v311, %v303
    %v400 = vpack.c.b16 %v312, %v304
    %v401 = vpack.c.b16 %v313, %v305
    %v402 = vpack.c.b16 %v314, %v306
    %v403 = vpack.c.b16 %v323, %v315
    %v404 = vpack.c.b16 %v324, %v316
    %v405 = vpack.c.b16 %v325, %v317
    %v406 = vpack.c.b16 %v326, %v318
    %v407 = vpack.c.b16 %v327, %v319
    %v408 = vpack.c.b16 %v328, %v320
    %v409 = vpack.c.b16 %v329, %v321
    %v410 = vpack.c.b16 %v330, %v322
    %v411 = vpack.c.b16 %v339, %v331
    %v412 = vpack.c.b16 %v340, %v332
    %v413 = vpack.c.b16 %v341, %v333
    %v414 = vpack.c.b16 %v342, %v334
    %v415 = vpack.c.b16 %v343, %v335
    %v416 = vpack.c.b16 %v344, %v336
    %v417 = vpack.c.b16 %v345, %v337
    %v418 = vpack.c.b16 %v346, %v338
    %v419 = vpack.c.b16 %v355, %v347
    %v420 = vpack.c.b16 %v356, %v348
    %v421 = vpack.c.b16 %v357, %v349
    %v422 = vpack.c.b16 %v358, %v350
    %v423 = vpack.c.b16 %v359, %v351
    %v424 = vpack.c.b16 %v360, %v352
    %v425 = vpack.c.b16 %v361, %v353
    %v426 = vpack.c.b16 %v362, %v354
    %491 = vmatprep.subr.bf16.mxu0 %v364
    %492 = vmatpush1.bf16.xpose.msra.mxu0 %v363
    %493 = vmatprep.subr.bf16.mxu0 %v372
    %494 = vmatpush1.bf16.xpose.msra.mxu0 %v371
    %495 = vmatprep.subr.bf16.mxu0 %v380
    %496 = vmatpush1.bf16.xpose.msra.mxu0 %v379
    %497 = vmatprep.subr.bf16.mxu0 %v388
    %498 = vmatpush1.bf16.xpose.msra.mxu0 %v387
    %499 = vmatprep.subr.bf16.mxu0 %v396
    %500 = vmatpush1.bf16.xpose.msra.mxu0 %v395
    %501 = vmatprep.subr.bf16.mxu0 %v404
    %502 = vmatpush1.bf16.xpose.msra.mxu0 %v403
    %503 = vmatprep.subr.bf16.mxu0 %v412
    %504 = vmatpush1.bf16.xpose.msra.mxu0 %v411
    %505 = vmatprep.subr.bf16.mxu0 %v420
    %506 = vmatpush1.bf16.xpose.msra.mxu0 %v419
    %507 = vmatprep.subr.bf16.mxu0 0
    %508 = vmatpush1.bf16.xpose.msra.mxu0 0
    %509 = vmatprep.subr.bf16.mxu0 0
    %510 = vmatpush1.bf16.xpose.msra.mxu0 0
    %511 = vmatprep.subr.bf16.mxu0 0
    %512 = vmatpush1.bf16.xpose.msra.mxu0 0
    %513 = vmatprep.subr.bf16.mxu0 0
    %514 = vmatpush1.bf16.xpose.msra.mxu0 0
    %515 = vmatprep.subr.bf16.mxu0 0
    %516 = vmatpush1.bf16.xpose.msra.mxu0 0
    %517 = vmatprep.subr.bf16.mxu0 0
    %518 = vmatpush1.bf16.xpose.msra.mxu0 0
    %519 = vmatprep.subr.bf16.mxu0 0
    %520 = vmatpush1.bf16.xpose.msra.mxu0 0
    %521 = vmatprep.subr.bf16.mxu0 0
    %522 = vmatpush1.bf16.xpose.msra.mxu0 0
    %523 = vmatprep.mubr.bf16.mxu0 %v151
    %524 = vmatmul.mubr.bf16.gmra.mrb[0].mxu0 %v137
    %v525 = vpop.f32.mrb[0].mxu0
    %v526 = vadd.f32 0.0, %v525
    %v527 = vpop.f32.mrb[0].mxu0
    %v528 = vpop.f32.mrb[0].mxu0
    %v529 = vpop.f32.mrb[0].mxu0
    %530 = vdwg.mxu0
    %531 = vmatprep.subr.bf16.mxu0 %v366
    %532 = vmatpush1.bf16.xpose.msra.mxu0 %v365
    %533 = vmatprep.subr.bf16.mxu0 %v374
    %534 = vmatpush1.bf16.xpose.msra.mxu0 %v373
    %535 = vmatprep.subr.bf16.mxu0 %v382
    %536 = vmatpush1.bf16.xpose.msra.mxu0 %v381
    %537 = vmatprep.subr.bf16.mxu0 %v390
    %538 = vmatpush1.bf16.xpose.msra.mxu0 %v389
    %539 = vmatprep.subr.bf16.mxu0 %v398
    %540 = vmatpush1.bf16.xpose.msra.mxu0 %v397
    %541 = vmatprep.subr.bf16.mxu0 %v406
    %542 = vmatpush1.bf16.xpose.msra.mxu0 %v405
    %543 = vmatprep.subr.bf16.mxu0 %v414
    %544 = vmatpush1.bf16.xpose.msra.mxu0 %v413
    %545 = vmatprep.subr.bf16.mxu0 %v422
    %546 = vmatpush1.bf16.xpose.msra.mxu0 %v421
    %547 = vmatprep.subr.bf16.mxu0 0
    %548 = vmatpush1.bf16.xpose.msra.mxu0 0
    %549 = vmatprep.subr.bf16.mxu0 0
    %550 = vmatpush1.bf16.xpose.msra.mxu0 0
    %551 = vmatprep.subr.bf16.mxu0 0
    %552 = vmatpush1.bf16.xpose.msra.mxu0 0
    %553 = vmatprep.subr.bf16.mxu0 0
    %554 = vmatpush1.bf16.xpose.msra.mxu0 0
    %555 = vmatprep.subr.bf16.mxu0 0
    %556 = vmatpush1.bf16.xpose.msra.mxu0 0
    %557 = vmatprep.subr.bf16.mxu0 0
    %558 = vmatpush1.bf16.xpose.msra.mxu0 0
    %559 = vmatprep.subr.bf16.mxu0 0
    %560 = vmatpush1.bf16.xpose.msra.mxu0 0
    %561 = vmatprep.subr.bf16.mxu0 0
    %562 = vmatpush1.bf16.xpose.msra.mxu0 0
    %563 = vmatprep.mubr.bf16.mxu0 %v161
    %564 = vmatmul.mubr.bf16.gmra.mrb[0].mxu0 %v159
    %v565 = vpop.f32.mrb[0].mxu0
    %v566 = vadd.f32 %v526, %v565
    %v567 = vpop.f32.mrb[0].mxu0
    %v568 = vpop.f32.mrb[0].mxu0
    %v569 = vpop.f32.mrb[0].mxu0
    %570 = vdwg.mxu0
    %571 = vmatprep.subr.bf16.mxu0 %v368
    %572 = vmatpush1.bf16.xpose.msra.mxu0 %v367
    %573 = vmatprep.subr.bf16.mxu0 %v376
    %574 = vmatpush1.bf16.xpose.msra.mxu0 %v375
    %575 = vmatprep.subr.bf16.mxu0 %v384
    %576 = vmatpush1.bf16.xpose.msra.mxu0 %v383
    %577 = vmatprep.subr.bf16.mxu0 %v392
    %578 = vmatpush1.bf16.xpose.msra.mxu0 %v391
    %579 = vmatprep.subr.bf16.mxu0 %v400
    %580 = vmatpush1.bf16.xpose.msra.mxu0 %v399
    %581 = vmatprep.subr.bf16.mxu0 %v408
    %582 = vmatpush1.bf16.xpose.msra.mxu0 %v407
    %583 = vmatprep.subr.bf16.mxu0 %v416
    %584 = vmatpush1.bf16.xpose.msra.mxu0 %v415
    %585 = vmatprep.subr.bf16.mxu0 %v424
    %586 = vmatpush1.bf16.xpose.msra.mxu0 %v423
    %587 = vmatprep.subr.bf16.mxu0 0
    %588 = vmatpush1.bf16.xpose.msra.mxu0 0
    %589 = vmatprep.subr.bf16.mxu0 0
    %590 = vmatpush1.bf16.xpose.msra.mxu0 0
    %591 = vmatprep.subr.bf16.mxu0 0
    %592 = vmatpush1.bf16.xpose.msra.mxu0 0
    %593 = vmatprep.subr.bf16.mxu0 0
    %594 = vmatpush1.bf16.xpose.msra.mxu0 0
    %595 = vmatprep.subr.bf16.mxu0 0
    %596 = vmatpush1.bf16.xpose.msra.mxu0 0
    %597 = vmatprep.subr.bf16.mxu0 0
    %598 = vmatpush1.bf16.xpose.msra.mxu0 0
    %599 = vmatprep.subr.bf16.mxu0 0
    %600 = vmatpush1.bf16.xpose.msra.mxu0 0
    %601 = vmatprep.subr.bf16.mxu0 0
    %602 = vmatpush1.bf16.xpose.msra.mxu0 0
    %603 = vmatprep.mubr.bf16.mxu0 %v158
    %604 = vmatmul.mubr.bf16.gmra.mrb[0].mxu0 %v144
    %v605 = vpop.f32.mrb[0].mxu0
    %v606 = vadd.f32 %v566, %v605
    %v607 = vpop.f32.mrb[0].mxu0
    %v608 = vpop.f32.mrb[0].mxu0
    %v609 = vpop.f32.mrb[0].mxu0
    %610 = vdwg.mxu0
    %611 = vmatprep.subr.bf16.mxu0 %v370
    %612 = vmatpush1.bf16.xpose.msra.mxu0 %v369
    %613 = vmatprep.subr.bf16.mxu0 %v378
    %614 = vmatpush1.bf16.xpose.msra.mxu0 %v377
    %615 = vmatprep.subr.bf16.mxu0 %v386
    %616 = vmatpush1.bf16.xpose.msra.mxu0 %v385
    %617 = vmatprep.subr.bf16.mxu0 %v394
    %618 = vmatpush1.bf16.xpose.msra.mxu0 %v393
    %619 = vmatprep.subr.bf16.mxu0 %v402
    %620 = vmatpush1.bf16.xpose.msra.mxu0 %v401
    %621 = vmatprep.subr.bf16.mxu0 %v410
    %622 = vmatpush1.bf16.xpose.msra.mxu0 %v409
    %623 = vmatprep.subr.bf16.mxu0 %v418
    %624 = vmatpush1.bf16.xpose.msra.mxu0 %v417
    %625 = vmatprep.subr.bf16.mxu0 %v426
    %626 = vmatpush1.bf16.xpose.msra.mxu0 %v425
    %627 = vmatprep.subr.bf16.mxu0 0
    %628 = vmatpush1.bf16.xpose.msra.mxu0 0
    %629 = vmatprep.subr.bf16.mxu0 0
    %630 = vmatpush1.bf16.xpose.msra.mxu0 0
    %631 = vmatprep.subr.bf16.mxu0 0
    %632 = vmatpush1.bf16.xpose.msra.mxu0 0
    %633 = vmatprep.subr.bf16.mxu0 0
    %634 = vmatpush1.bf16.xpose.msra.mxu0 0
    %635 = vmatprep.subr.bf16.mxu0 0
    %636 = vmatpush1.bf16.xpose.msra.mxu0 0
    %637 = vmatprep.subr.bf16.mxu0 0
    %638 = vmatpush1.bf16.xpose.msra.mxu0 0
    %639 = vmatprep.subr.bf16.mxu0 0
    %640 = vmatpush1.bf16.xpose.msra.mxu0 0
    %641 = vmatprep.subr.bf16.mxu0 0
    %642 = vmatpush1.bf16.xpose.msra.mxu0 0
    %643 = vmatprep.mubr.bf16.mxu0 %v162
    %644 = vmatmul.mubr.bf16.gmra.mrb[0].mxu0 %v160
    %v645 = vpop.f32.mrb[0].mxu0
    %v646 = vadd.f32 %v606, %v645
    %v647 = vpop.f32.mrb[0].mxu0
    %v648 = vpop.f32.mrb[0].mxu0
    %v649 = vpop.f32.mrb[0].mxu0
    %650 = vdwg.mxu0
    %v651 = vadd.f32 %v47, %v646
    %652 = vst [vmem:[#allocation7] sm:$0x3] %v651
    // Predicated region
    $region26: #{tpu_custom_call.1} parent=1 // pred_check
      %p653 = pneg %p42
    $region27: #{tpu_custom_call.1} parent=1 // pred_check_branch
      %655 = sbr.rel (%p653) target = $region29
    $region28: #{tpu_custom_call.1} parent=1 // pred_region
      %v656 = vld [vmem:[#allocation7] sm:$0x3]
      %v657 = vld [vmem:[%s2] sm:$0x1]
      %v659 = vlaneseq
      %v660 = vshrl.u32 %v659, 7
      %v661 = vsub.s32 0, %v660
      %v662 = vrot.slane %v657, %v661
      %v664 = vadd.f32 %v656, %v662
      %665 = vst [vmem:[#allocation7] sm:$0x3] %v664
    $region29: #{tpu_custom_call.1} parent=1 // pred_fallthru
      _
    // Predicated region
    $region30: #{tpu_custom_call.1} parent=1 // pred_check
      _
    $region31: #{tpu_custom_call.1} parent=1 // pred_check_branch
      %667 = sbr.rel (0) target = $region33
    $region32: #{tpu_custom_call.1} parent=1 // pred_region
      %s669 = ssub.s32 32, 32
      %670 = vsyncadd [#allocation4], %s669
      %s672 = sshll.u32 [#allocation7], 4
      %s673 = int_to_ptr.vmem [resolvable:$true] %s672
      %675 = dma.vmem_to_hbm [thread:$0]  %s673, 32, %s3, [#allocation4]
    $region33: #{tpu_custom_call.1} parent=1 // pred_fallthru
      _
    // Predicated region
    $region34: #{tpu_custom_call.1} parent=1 // pred_check
      _
    $region35: #{tpu_custom_call.1} parent=1 // pred_check_branch
      %677 = sbr.rel (0) target = $region37
    $region36: #{tpu_custom_call.1} parent=1 // pred_region
      %678 = dma.done [#allocation4], 32
    $region37: #{tpu_custom_call.1} parent=1 // pred_fallthru
      _
    %679 = vsyncpa [#allocation3], 1
    %680 = vsyncpa [#allocation6], 1
    %681 = vsyncpa [#allocation4], 1

</llo_original>
